<compile_context>
chip_gen: v6e
topology: v6e:2x2x1
jax: 0.10.0
libtpu: 0.0.40
codegen_flags: <defaults>
</compile_context>

<pallas_src>
import functools

import jax
import jax.numpy as jnp
from jax.experimental import pallas as pl
from jax.experimental.pallas import tpu as pltpu

_LANE_CHOICES = (1024, 512, 256, 128)   # lane-dense last-dim candidates
_TARGET_TILE_BYTES = 2 * 1024 * 1024    # ~2 MiB per tile (4x under v5e scoped VMEM)


def _mix32(h):
    """splitmix32-style finalizer: u32 -> u32 with good avalanche."""
    h = h ^ (h >> jnp.uint32(16))
    h = h * jnp.uint32(0x7FEB352D)
    h = h ^ (h >> jnp.uint32(15))
    h = h * jnp.uint32(0x846CA68B)
    h = h ^ (h >> jnp.uint32(16))
    return h


def _dropout_kernel(seed_ref, x_ref, o_ref, *, keep_threshold, inv_keep):
    block_rows, lane = x_ref.shape

    # Global element index of every lane in this tile (counter for the hash).
    row = jax.lax.broadcasted_iota(jnp.int32, (block_rows, lane), 0)
    col = jax.lax.broadcasted_iota(jnp.int32, (block_rows, lane), 1)
    row = row + pl.program_id(0) * block_rows
    idx = row.astype(jnp.uint32) * jnp.uint32(lane) + col.astype(jnp.uint32)

    seed = seed_ref[0].astype(jnp.uint32)
    h = _mix32(idx + seed * jnp.uint32(0x9E3779B9))

    # Drop the top bit -> uniform in [0, 2^31); signed compare is safe everywhere.
    # (keep_threshold is clamped to 2^31-1, biasing keep_prob down by <=2^-31.)
    r = (h >> jnp.uint32(1)).astype(jnp.int32)
    keep = r < jnp.int32(keep_threshold)

    xv = x_ref[...]
    scale = jnp.asarray(inv_keep, dtype=xv.dtype)
    o_ref[...] = jnp.where(keep, xv * scale, jnp.zeros_like(xv))


def my_dropout(x, p: float = 0.5, training: bool = True, seed: int = 0):
    if p < 0.0 or p > 1.0:
        raise ValueError(
            "dropout probability has to be between 0 and 1, but got {}".format(p))
    if not training or p == 0.0:
        return x
    if p == 1.0:
        return jnp.zeros_like(x)

    keep_prob = 1.0 - p
    keep_threshold = min(int(round(keep_prob * (2 ** 31))), 2 ** 31 - 1)
    inv_keep = 1.0 / keep_prob

    orig_shape = x.shape
    dtype = x.dtype
    itemsize = jnp.dtype(dtype).itemsize
    # dtype-aware sublane granule: 8 for f32, 16 for bf16, 32 for int8/fp8
    granule = max(8, 32 // itemsize)

    flat = x.reshape(-1)
    n = flat.size

    # Pick a lane width that divides n exactly (avoids pad + trailing-slice HBM
    # passes); prefer widths that also give >= one full sublane granule of rows.
    lane = None
    for cand in _LANE_CHOICES:
        if n % cand == 0 and (n // cand) >= granule:
            lane = cand
            break
    if lane is None:
        for cand in _LANE_CHOICES:
            if n % cand == 0:
                lane = cand
                break
    padded = False
    if lane is None:
        # Awkward sizes only: pad to a lane multiple (costs one extra copy).
        lane = 128
        pad = (-n) % lane
        flat = jnp.pad(flat, (0, pad))
        padded = True

    rows = flat.size // lane
    x2d = flat.reshape(rows, lane)

    if rows <= granule:
        block_rows = rows                      # full first dim (allowed by Mosaic)
    else:
        block_rows = max(granule,
                         min(rows, _TARGET_TILE_BYTES // (lane * itemsize)))
        block_rows = (block_rows // granule) * granule
    grid = pl.cdiv(rows, block_rows)           # partial edge block is masked on write

    seed_arr = jnp.asarray([seed], dtype=jnp.int32)

    kernel = functools.partial(
        _dropout_kernel,
        keep_threshold=keep_threshold,
        inv_keep=inv_keep,
    )

    out2d = pl.pallas_call(
        kernel,
        out_shape=jax.ShapeDtypeStruct((rows, lane), dtype),
        grid_spec=pltpu.PrefetchScalarGridSpec(
            num_scalar_prefetch=1,
            grid=(grid,),
            in_specs=[pl.BlockSpec((block_rows, lane), lambda i, seed: (i, 0))],
            out_specs=pl.BlockSpec((block_rows, lane), lambda i, seed: (i, 0)),
        ),
        compiler_params=pltpu.CompilerParams(
            # Stateless per-element hash -> tile order irrelevant -> let Mosaic
            # shard the grid across TensorCores (v7x megacore).
            dimension_semantics=("parallel",)),
        cost_estimate=pl.CostEstimate(
            flops=10 * rows * lane,
            transcendentals=0,
            bytes_accessed=2 * rows * lane * itemsize),
    )(seed_arr, x2d)

    out = out2d.reshape(-1)
    if padded:
        out = out[:n]
    return out.reshape(orig_shape)


if __name__ == "__main__":
    key = jax.random.PRNGKey(0)
    x = jax.random.normal(key, (2, 4, 16, 16), dtype=jnp.float32)

    p = 0.5
    out_train = my_dropout(x, p=p, training=True, seed=1234)
    out_eval = my_dropout(x, p=p, training=False)
    jax.block_until_ready(out_train)
    jax.block_until_ready(out_eval)

    # Sanity checks: eval is identity; training values are either 0 or x/(1-p).
    assert out_train.shape == x.shape and out_train.dtype == x.dtype
    assert jnp.allclose(out_eval, x)
    scaled = x / (1.0 - p)
    ok = jnp.logical_or(jnp.isclose(out_train, 0.0),
                        jnp.isclose(out_train, scaled, rtol=1e-5, atol=1e-6))
    assert bool(jnp.all(ok))
    # Mask should drop a nontrivial fraction (not degenerate all-keep/all-drop).
    frac_kept = jnp.mean((out_train != 0.0).astype(jnp.float32))
    assert 0.2 < float(frac_kept) < 0.8

    print("KERNEL_OK")
</pallas_src>

<mosaic_0001>
module attributes {stable_mosaic.version = 11 : i64} {
  func.func @_dropout_kernel(%arg0: i32, %arg1: memref<1xi32, #tpu.memory_space<smem>>, %arg2: memref<8x256xf32, #tpu.memory_space<vmem>>, %arg3: memref<8x256xf32, #tpu.memory_space<vmem>>) attributes {dimension_semantics = [#tpu.dimension_semantics<parallel>], iteration_bounds = array<i64: 1>, scalar_prefetch = 1 : i64, scratch_operands = 0 : i64, tpu.core_type = #tpu.core_type<tc>, window_params = [{transform_indices = @transform_0, window_bounds = array<i64: 8, 256>}, {transform_indices = @transform_1, window_bounds = array<i64: 8, 256>}]} {
    %0 = tpu.iota {dimensions = array<i32: 0>} : vector<8x256xi32>
    %1 = tpu.iota {dimensions = array<i32: 1>} : vector<8x256xi32>
    %c8_i32 = arith.constant 8 : i32
    %2 = arith.muli %arg0, %c8_i32 : i32
    %3 = vector.broadcast %2 : i32 to vector<8x256xi32>
    %4 = arith.addi %0, %3 : vector<8x256xi32>
    %c256_i32 = arith.constant 256 : i32
    %5 = vector.broadcast %c256_i32 : i32 to vector<8x256xi32>
    %6 = arith.muli %4, %5 : vector<8x256xi32>
    %7 = arith.addi %6, %1 : vector<8x256xi32>
    %c0 = arith.constant 0 : index
    %8 = memref.load %arg1[%c0] : memref<1xi32, #tpu.memory_space<smem>>
    %c-1640531527_i32 = arith.constant -1640531527 : i32
    %9 = arith.muli %8, %c-1640531527_i32 : i32
    %10 = vector.broadcast %9 : i32 to vector<8x256xi32>
    %11 = arith.addi %7, %10 : vector<8x256xi32>
    %c16_i32 = arith.constant 16 : i32
    %12 = vector.broadcast %c16_i32 : i32 to vector<8x256xi32>
    %13 = arith.shrui %11, %12 : vector<8x256xi32>
    %14 = arith.xori %11, %13 : vector<8x256xi32>
    %c2146121005_i32 = arith.constant 2146121005 : i32
    %15 = vector.broadcast %c2146121005_i32 : i32 to vector<8x256xi32>
    %16 = arith.muli %14, %15 : vector<8x256xi32>
    %c15_i32 = arith.constant 15 : i32
    %17 = vector.broadcast %c15_i32 : i32 to vector<8x256xi32>
    %18 = arith.shrui %16, %17 : vector<8x256xi32>
    %19 = arith.xori %16, %18 : vector<8x256xi32>
    %c-2073254261_i32 = arith.constant -2073254261 : i32
    %20 = vector.broadcast %c-2073254261_i32 : i32 to vector<8x256xi32>
    %21 = arith.muli %19, %20 : vector<8x256xi32>
    %c16_i32_0 = arith.constant 16 : i32
    %22 = vector.broadcast %c16_i32_0 : i32 to vector<8x256xi32>
    %23 = arith.shrui %21, %22 : vector<8x256xi32>
    %24 = arith.xori %21, %23 : vector<8x256xi32>
    %c1_i32 = arith.constant 1 : i32
    %25 = vector.broadcast %c1_i32 : i32 to vector<8x256xi32>
    %26 = arith.shrui %24, %25 : vector<8x256xi32>
    %c1073741824_i32 = arith.constant 1073741824 : i32
    %27 = vector.broadcast %c1073741824_i32 : i32 to vector<8x256xi32>
    %28 = arith.cmpi slt, %26, %27 : vector<8x256xi32>
    %c0_1 = arith.constant 0 : index
    %c0_2 = arith.constant 0 : index
    %29 = vector.load %arg2[%c0_1, %c0_2] : memref<8x256xf32, #tpu.memory_space<vmem>>, vector<8x256xf32>
    %cst = arith.constant 2.000000e+00 : f32
    %30 = vector.broadcast %cst : f32 to vector<8x256xf32>
    %31 = arith.mulf %29, %30 : vector<8x256xf32>
    %cst_3 = arith.constant 0.000000e+00 : f32
    %32 = vector.broadcast %cst_3 : f32 to vector<8x256xf32>
    %33 = arith.select %28, %31, %32 : vector<8x256xi1>, vector<8x256xf32>
    %c0_4 = arith.constant 0 : index
    %c0_5 = arith.constant 0 : index
    %34 = vector.load %arg3[%c0_4, %c0_5] : memref<8x256xf32, #tpu.memory_space<vmem>>, vector<8x256xf32>
    tpu.vector_store %arg3[%c0_4, %c0_5], %33 {strides = array<i32>} : memref<8x256xf32, #tpu.memory_space<vmem>>, vector<8x256xf32>,
    return
  }
  func.func @transform_0(%arg0: i32, %arg1: memref<1xi32, #tpu.memory_space<smem>>) -> (i32, i32) {
    %c0_i32 = arith.constant 0 : i32
    %c0_i32_0 = arith.constant 0 : i32
    return %arg0, %c0_i32 : i32, i32
  }
  func.func @transform_1(%arg0: i32, %arg1: memref<1xi32, #tpu.memory_space<smem>>) -> (i32, i32) {
    %c0_i32 = arith.constant 0 : i32
    %c0_i32_0 = arith.constant 0 : i32
    return %arg0, %c0_i32 : i32, i32
  }
}

</mosaic_0001>

<llo_original>
// kernel: tpu_custom_call.1
$region0: #{tpu_custom_call.1}
  #allocation0 [shape = 'u32[]', space=smem, size = 0x4, offset = 0x4, fixed_abs, tag = 'smem constant byte address 0x4 - core index']
  #allocation1 [shape = 'u32[144,128]{1,0:T(1,128)}', space=vmem, size = 0x12000, scoped, tag = 'internal scratch']
  #allocation2 [shape = 's32[1]{0}', space=sflag, size = 0x4, scoped, tag = 'scoped memory for tpu_custom_call.1']
  #allocation3 [shape = 's32[1]{0:T(128)S(6)}', space=smem, size = 0x200, scoped, tag = 'prefetched SMEM operand 0']
  %s0 = inlined_call_operand.<no memory space> [shape: s32[1], index: 0, kind: input, shape index: {}]
  %s1 = inlined_call_operand.hbm [shape: f32[8,256], index: 1, kind: input, shape index: {}]
  %s2 = inlined_call_operand.hbm [shape: f32[8,256], index: 2, kind: output, shape index: {}]
  %s3 = sld [smem:[#allocation0]]
  $region18: #{tpu_custom_call.1} parent=0
    _
  %s5 = ssub.s32 1, %s3
  %s6 = scalar_select 0, %s5, %s3
  %7 = sst [smem:[#allocation3]] %s0
  $region1: #{tpu_custom_call.1} parent=0
    #allocation4 [shape = 'u8[8192]{0}', space=vmem, size = 0x2000, scoped, tag = 'input window, operand 1, single buffered']
    #allocation5 [shape = 's32[1]{0}', space=sflag, size = 0x4, scoped, tag = 'scoped memory for tpu_custom_call.1']
    #allocation6 [shape = 's32[1]{0}', space=sflag, size = 0x4, scoped, tag = 'scoped memory for tpu_custom_call.1']
    #allocation7 [shape = 'u8[8192]{0}', space=vmem, size = 0x2000, scoped, tag = 'output window, operand 0, single buffered']
    %8 = vsyncpa [#allocation5], 0
    %9 = vsyncpa [#allocation6], 0
    // Predicated region
    $region2: #{tpu_custom_call.1} parent=1 // pred_check
      _
    $region3: #{tpu_custom_call.1} parent=1 // pred_check_branch
      %11 = sbr.rel (0) target = $region5
    $region4: #{tpu_custom_call.1} parent=1 // pred_region
      %s13 = ssub.s32 256, 256
      %14 = vsyncadd [#allocation5], %s13
      %s16 = sshll.u32 [#allocation4], 4
      %s17 = int_to_ptr.vmem [resolvable:$true] %s16
      %19 = dma.hbm_to_vmem [thread:$0]  %s1, 256, %s17, [#allocation5]
    $region5: #{tpu_custom_call.1} parent=1 // pred_fallthru
      _
    // Predicated region
    $region6: #{tpu_custom_call.1} parent=1 // pred_check
      _
    $region7: #{tpu_custom_call.1} parent=1 // pred_check_branch
      %21 = sbr.rel (0) target = $region9
    $region8: #{tpu_custom_call.1} parent=1 // pred_region
      %22 = dma.done [#allocation5], 256
    $region9: #{tpu_custom_call.1} parent=1 // pred_fallthru
      _
    %v23 = vlaneseq
    %v24 = vshrl.u32 %v23, 7
    %v25 = vlaneseq
    %v26 = vand.u32 %v25, 127
    %v27 = vadd.s32 %v26, 128
    %s28 = smul.u32 0, 8
    %v29 = vstv %s28
    %v30 = vadd.s32 %v24, %v29
    %v31 = vmul.u32 %v30, 256
    %v32 = vadd.s32 %v31, %v26
    %v33 = vadd.s32 %v31, %v27
    %s34 = sld [smem:[#allocation3]]
    %s35 = smul.u32 %s34, 2654435769
    %v36 = vstv %s35
    %v37 = vadd.s32 %v32, %v36
    %v38 = vadd.s32 %v33, %v36
    %v39 = vshrl.u32 %v37, 16
    %v40 = vshrl.u32 %v38, 16
    %v41 = vxor.u32 %v37, %v39
    %v42 = vxor.u32 %v38, %v40
    %v43 = vmul.u32 %v41, 2146121005
    %v44 = vmul.u32 %v42, 2146121005
    %v45 = vshrl.u32 %v43, 15
    %v46 = vshrl.u32 %v44, 15
    %v47 = vxor.u32 %v43, %v45
    %v48 = vxor.u32 %v44, %v46
    %v49 = vmul.u32 %v47, 2221713035
    %v50 = vmul.u32 %v48, 2221713035
    %v51 = vshrl.u32 %v49, 16
    %v52 = vshrl.u32 %v50, 16
    %v53 = vxor.u32 %v49, %v51
    %v54 = vxor.u32 %v50, %v52
    %v55 = vshrl.u32 %v53, 1
    %v56 = vshrl.u32 %v54, 1
    %vm57 = vcmp.lt.s32.totalorder %v55, 1073741824
    %vm58 = vcmp.lt.s32.totalorder %v56, 1073741824
    %v59 = vld [vmem:[#allocation4] sm:$0xff]
    %v60 = vld [vmem:[#allocation4 + $0x8] sm:$0xff]
    %v61 = vmul.f32 %v59, 2.0
    %v62 = vmul.f32 %v60, 2.0
    %v63 = vsel %vm57, %v61, 0.0
    %v64 = vsel %vm58, %v62, 0.0
    %65 = vst [vmem:[#allocation7] sm:$0xff] %v63
    %66 = vst [vmem:[#allocation7 + $0x8] sm:$0xff] %v64
    // Predicated region
    $region10: #{tpu_custom_call.1} parent=1 // pred_check
      _
    $region11: #{tpu_custom_call.1} parent=1 // pred_check_branch
      %68 = sbr.rel (0) target = $region13
    $region12: #{tpu_custom_call.1} parent=1 // pred_region
      %s70 = ssub.s32 256, 256
      %71 = vsyncadd [#allocation6], %s70
      %s73 = sshll.u32 [#allocation7], 4
      %s74 = int_to_ptr.vmem [resolvable:$true] %s73
      %76 = dma.vmem_to_hbm [thread:$0]  %s74, 256, %s2, [#allocation6]
    $region13: #{tpu_custom_call.1} parent=1 // pred_fallthru
      _
    // Predicated region
    $region14: #{tpu_custom_call.1} parent=1 // pred_check
      _
    $region15: #{tpu_custom_call.1} parent=1 // pred_check_branch
      %78 = sbr.rel (0) target = $region17
    $region16: #{tpu_custom_call.1} parent=1 // pred_region
      %79 = dma.done [#allocation6], 256
    $region17: #{tpu_custom_call.1} parent=1 // pred_fallthru
      _
    %80 = vsyncpa [#allocation5], 1
    %81 = vsyncpa [#allocation6], 1

</llo_original>
